<compile_context>
chip_gen: v5e
topology: v5e:2x2
jax: 0.10.0
libtpu: 0.0.40
codegen_flags: <defaults>
</compile_context>

<pallas_src>
import jax
import jax.numpy as jnp
from jax.experimental import pallas as pl
from jax.experimental.pallas import tpu as pltpu

NEG_SLOPE = 0.01  # torch.nn.LeakyReLU default negative_slope


def _round_up(a: int, b: int) -> int:
    return (a + b - 1) // b * b


def linear_block_kernel(x_ref, w_ref, p_ref, o_ref):
    # x_ref: (tile_m, n_in_p)      bf16 batch tile
    # w_ref: (n_in_p, tile_nout)   bf16 weight column tile (pre-transposed)
    # p_ref: (3, tile_nout)        f32 [bias; bn_scale; bn_shift]
    # o_ref: (tile_m, tile_nout)   f32 output tile
    y = jnp.dot(x_ref[...], w_ref[...],
                preferred_element_type=jnp.float32)        # MXU, bf16 in / f32 acc
    bias  = p_ref[0:1, :]                                   # (1, tile_nout) f32
    scale = p_ref[1:2, :]
    shift = p_ref[2:3, :]
    y = y + bias
    y = jnp.where(y >= 0.0, y, NEG_SLOPE * y)                # LeakyReLU
    y = y * scale + shift                                    # BatchNorm1d (eval, folded)
    o_ref[...] = y.astype(o_ref.dtype)


def linear_block_forward(x, w_t, b, scale, shift, *, tile_m=256, tile_nout=256):
    """x: (N, n_in) f32; w_t: (n_in, n_out) f32 (= W.T); b/scale/shift: (n_out,) f32."""
    N, n_in = x.shape
    n_out = w_t.shape[1]

    # --- tile / padding selection -------------------------------------------
    # batch tile: multiple of 8 sublanes, no bigger than the (padded) problem.
    tile_m = min(_round_up(tile_m, 8), _round_up(N, 8))
    M_p = _round_up(N, tile_m)
    # feature dims: lane-dense multiples of 128.
    n_in_p = _round_up(n_in, 128)
    tile_nout = min(_round_up(tile_nout, 128), _round_up(n_out, 128))
    n_out_p = _round_up(n_out, tile_nout)

    # --- pad + cast inputs at the boundary ----------------------------------
    x_p = jnp.zeros((M_p, n_in_p), jnp.bfloat16)
    x_p = x_p.at[:N, :n_in].set(x.astype(jnp.bfloat16))
    w_p = jnp.zeros((n_in_p, n_out_p), jnp.bfloat16)
    w_p = w_p.at[:n_in, :n_out].set(w_t.astype(jnp.bfloat16))
    # Stack bias / bn_scale / bn_shift into one f32 parameter block.
    params = jnp.zeros((3, n_out_p), jnp.float32)
    params = params.at[0, :n_out].set(b)
    params = params.at[1, :n_out].set(scale)
    params = params.at[2, :n_out].set(shift)

    grid = (M_p // tile_m, n_out_p // tile_nout)

    # --- scoped-VMEM sizing (double-buffered tiles) --------------------------
    vmem_bytes = 2 * (
        tile_m * n_in_p * 2          # x tile, bf16
        + n_in_p * tile_nout * 2     # w tile, bf16
        + tile_m * tile_nout * 4     # out tile, f32
        + 3 * tile_nout * 4          # params, f32
    )
    cp_kwargs = dict(dimension_semantics=("parallel", "parallel"))
    if vmem_bytes > 30 * 1024 * 1024:
        # Raise scoped VMEM (default 16/32 MiB) for big resident tiles; keep
        # below v7x's 64 MiB physical VMEM.
        cp_kwargs["vmem_limit_bytes"] = min(int(vmem_bytes * 1.25), 60 * 1024 * 1024)

    out_p = pl.pallas_call(
        linear_block_kernel,
        out_shape=jax.ShapeDtypeStruct((M_p, n_out_p), jnp.float32),
        grid_spec=pltpu.PrefetchScalarGridSpec(
            num_scalar_prefetch=0,
            grid=grid,
            in_specs=[
                pl.BlockSpec((tile_m, n_in_p), lambda i, j: (i, 0)),
                pl.BlockSpec((n_in_p, tile_nout), lambda i, j: (0, j)),
                pl.BlockSpec((3, tile_nout), lambda i, j: (0, j)),
            ],
            out_specs=pl.BlockSpec((tile_m, tile_nout), lambda i, j: (i, j)),
        ),
        compiler_params=pltpu.CompilerParams(**cp_kwargs),
    )(x_p, w_p, params)

    return out_p[:N, :n_out]


def reference_forward(x, w_t, b, scale, shift):
    y = x @ w_t + b[None, :]
    y = jnp.where(y >= 0.0, y, NEG_SLOPE * y)
    return y * scale[None, :] + shift[None, :]


def _make_case(key, N, n_input, n_output, eps=1e-5):
    kx, kw, kb, kg, kbt = jax.random.split(key, 5)
    # nn.Linear default init: U[-1/sqrt(fan_in), 1/sqrt(fan_in)]
    bound = 1.0 / (n_input ** 0.5)
    w = jax.random.uniform(kw, (n_output, n_input), jnp.float32, -bound, bound)
    b = jax.random.uniform(kb, (n_output,), jnp.float32, -bound, bound)
    # BatchNorm1d eval state (running_mean=0, running_var=1); non-trivial affine
    # to exercise the folded scale/shift path.
    gamma = 1.0 + 0.1 * jax.random.normal(kg, (n_output,), jnp.float32)
    beta = 0.1 * jax.random.normal(kbt, (n_output,), jnp.float32)
    running_mean = jnp.zeros((n_output,), jnp.float32)
    running_var = jnp.ones((n_output,), jnp.float32)
    scale = gamma / jnp.sqrt(running_var + eps)
    shift = beta - running_mean * scale
    x = jax.random.normal(kx, (N, n_input), jnp.float32)
    return x, w.T, b, scale, shift


if __name__ == "__main__":
    key = jax.random.PRNGKey(0)
    k1, k2 = jax.random.split(key, 2)

    # Case 1: toy shape from the module spec — single grid step (1, 1).
    # Case 2: unaligned shape exercising padding and a (2, 2) tile grid.
    cases = [
        (_make_case(k1, N=16, n_input=32, n_output=64), dict(tile_m=256, tile_nout=256)),
        (_make_case(k2, N=200, n_input=96, n_output=200), dict(tile_m=128, tile_nout=128)),
    ]

    for (x, w_t, b, scale, shift), tiles in cases:
        out = linear_block_forward(x, w_t, b, scale, shift, **tiles)
        out = jax.block_until_ready(out)
        assert out.shape == (x.shape[0], w_t.shape[1])

        # Tight check against the same bf16-rounded inputs (isolates kernel logic).
        x_c = x.astype(jnp.bfloat16).astype(jnp.float32)
        w_c = w_t.astype(jnp.bfloat16).astype(jnp.float32)
        ref_cast = reference_forward(x_c, w_c, b, scale, shift)
        assert jnp.allclose(out, ref_cast, atol=1e-4, rtol=1e-4)

        # Loose check against the full-f32 reference (bf16 input rounding only).
        ref_f32 = reference_forward(x, w_t, b, scale, shift)
        assert jnp.allclose(out, ref_f32, atol=5e-2, rtol=5e-2)

    print("KERNEL_OK")
</pallas_src>

<mosaic_0001>
module attributes {stable_mosaic.version = 11 : i64} {
  func.func @linear_block_kernel(%arg0: i32, %arg1: i32, %arg2: memref<16x128xbf16, #tpu.memory_space<vmem>>, %arg3: memref<128x128xbf16, #tpu.memory_space<vmem>>, %arg4: memref<3x128xf32, #tpu.memory_space<vmem>>, %arg5: memref<16x128xf32, #tpu.memory_space<vmem>>) attributes {dimension_semantics = [#tpu.dimension_semantics<parallel>, #tpu.dimension_semantics<parallel>], iteration_bounds = array<i64: 1, 1>, scalar_prefetch = 0 : i64, scratch_operands = 0 : i64, tpu.core_type = #tpu.core_type<tc>, window_params = [{transform_indices = @transform_0, window_bounds = array<i64: 16, 128>}, {transform_indices = @transform_1, window_bounds = array<i64: 128, 128>}, {transform_indices = @transform_2, window_bounds = array<i64: 3, 128>}, {transform_indices = @transform_3, window_bounds = array<i64: 16, 128>}]} {
    %c0 = arith.constant 0 : index
    %c0_0 = arith.constant 0 : index
    %0 = vector.load %arg2[%c0, %c0_0] : memref<16x128xbf16, #tpu.memory_space<vmem>>, vector<16x128xbf16>
    %c0_1 = arith.constant 0 : index
    %c0_2 = arith.constant 0 : index
    %1 = vector.load %arg3[%c0_1, %c0_2] : memref<128x128xbf16, #tpu.memory_space<vmem>>, vector<128x128xbf16>
    %cst = arith.constant dense<0.000000e+00> : vector<16x128xf32>
    %2 = tpu.matmul %0, %1, %cst {dimension_numbers = #tpu.dot_dimension_numbers<[1], [0], [0], [1], [0, 0, 1, 1], [], []>} : vector<16x128xbf16>, vector<128x128xbf16>, vector<16x128xf32> -> vector<16x128xf32>
    %c0_3 = arith.constant 0 : index
    %c0_4 = arith.constant 0 : index
    %3 = vector.load %arg4[%c0_3, %c0_4] : memref<3x128xf32, #tpu.memory_space<vmem>>, vector<1x128xf32>
    %c1 = arith.constant 1 : index
    %c0_5 = arith.constant 0 : index
    %4 = vector.load %arg4[%c1, %c0_5] : memref<3x128xf32, #tpu.memory_space<vmem>>, vector<1x128xf32>
    %c2 = arith.constant 2 : index
    %c0_6 = arith.constant 0 : index
    %5 = vector.load %arg4[%c2, %c0_6] : memref<3x128xf32, #tpu.memory_space<vmem>>, vector<1x128xf32>
    %6 = vector.broadcast %3 : vector<1x128xf32> to vector<16x128xf32>
    %7 = arith.addf %2, %6 : vector<16x128xf32>
    %cst_7 = arith.constant 0.000000e+00 : f32
    %8 = vector.broadcast %cst_7 : f32 to vector<16x128xf32>
    %9 = arith.cmpf oge, %7, %8 : vector<16x128xf32>
    %cst_8 = arith.constant 0.00999999977 : f32
    %10 = vector.broadcast %cst_8 : f32 to vector<16x128xf32>
    %11 = arith.mulf %10, %7 : vector<16x128xf32>
    %12 = arith.select %9, %7, %11 : vector<16x128xi1>, vector<16x128xf32>
    %13 = vector.broadcast %4 : vector<1x128xf32> to vector<16x128xf32>
    %14 = arith.mulf %12, %13 : vector<16x128xf32>
    %15 = vector.broadcast %5 : vector<1x128xf32> to vector<16x128xf32>
    %16 = arith.addf %14, %15 : vector<16x128xf32>
    %c0_9 = arith.constant 0 : index
    %c0_10 = arith.constant 0 : index
    %17 = vector.load %arg5[%c0_9, %c0_10] : memref<16x128xf32, #tpu.memory_space<vmem>>, vector<16x128xf32>
    tpu.vector_store %arg5[%c0_9, %c0_10], %16 {strides = array<i32>} : memref<16x128xf32, #tpu.memory_space<vmem>>, vector<16x128xf32>,
    return
  }
  func.func @transform_0(%arg0: i32, %arg1: i32) -> (i32, i32) {
    %c0_i32 = arith.constant 0 : i32
    %c0_i32_0 = arith.constant 0 : i32
    return %arg0, %c0_i32 : i32, i32
  }
  func.func @transform_1(%arg0: i32, %arg1: i32) -> (i32, i32) {
    %c0_i32 = arith.constant 0 : i32
    %c0_i32_0 = arith.constant 0 : i32
    return %c0_i32, %arg1 : i32, i32
  }
  func.func @transform_2(%arg0: i32, %arg1: i32) -> (i32, i32) {
    %c0_i32 = arith.constant 0 : i32
    %c0_i32_0 = arith.constant 0 : i32
    return %c0_i32, %arg1 : i32, i32
  }
  func.func @transform_3(%arg0: i32, %arg1: i32) -> (i32, i32) {
    %c0_i32 = arith.constant 0 : i32
    return %arg0, %arg1 : i32, i32
  }
}

</mosaic_0001>

<llo_original>
// kernel: tpu_custom_call.1
$region0: #{tpu_custom_call.1}
  #allocation0 [shape = 'u32[]', space=smem, size = 0x4, offset = 0x4, fixed_abs, tag = 'smem constant byte address 0x4 - core index']
  #allocation1 [shape = 'u32[72,128]{1,0:T(1,128)}', space=vmem, size = 0x9000, scoped, tag = 'internal scratch']
  %s0 = inlined_call_operand.hbm [shape: bf16[16,128], index: 0, kind: input, shape index: {}]
  %s1 = inlined_call_operand.hbm [shape: bf16[128,128], index: 1, kind: input, shape index: {}]
  %s2 = inlined_call_operand.hbm [shape: f32[3,128], index: 2, kind: input, shape index: {}]
  %s3 = inlined_call_operand.hbm [shape: f32[16,128], index: 3, kind: output, shape index: {}]
  %s4 = sld [smem:[#allocation0]]
  $region34: #{tpu_custom_call.1} parent=0
    _
  %s6 = ssub.s32 1, %s4
  %s7 = scalar_select 0, %s6, %s4
  $region1: #{tpu_custom_call.1} parent=0
    #allocation2 [shape = 'u8[4096]{0}', space=vmem, size = 0x1000, scoped, tag = 'input window, operand 0, single buffered']
    #allocation3 [shape = 's32[1]{0}', space=sflag, size = 0x4, scoped, tag = 'scoped memory for tpu_custom_call.1']
    #allocation4 [shape = 's32[1]{0}', space=sflag, size = 0x4, scoped, tag = 'scoped memory for tpu_custom_call.1']
    #allocation5 [shape = 'u8[32768]{0}', space=vmem, size = 0x8000, scoped, tag = 'input window, operand 1, single buffered']
    #allocation6 [shape = 's32[1]{0}', space=sflag, size = 0x4, scoped, tag = 'scoped memory for tpu_custom_call.1']
    #allocation7 [shape = 'u8[2048]{0}', space=vmem, size = 0x800, scoped, tag = 'input window, operand 2, single buffered']
    #allocation8 [shape = 'u8[8192]{0}', space=vmem, size = 0x2000, scoped, tag = 'output window, operand 0, single buffered']
    %8 = vsyncpa [#allocation3], 0
    %9 = vsyncpa [#allocation6], 0
    %10 = vsyncpa [#allocation4], 0
    // Predicated region
    $region2: #{tpu_custom_call.1} parent=1 // pred_check
      _
    $region3: #{tpu_custom_call.1} parent=1 // pred_check_branch
      %12 = sbr.rel (0) target = $region5
    $region4: #{tpu_custom_call.1} parent=1 // pred_region
      %14 = vsyncadd [#allocation3], 0
      %s15 = sshll.u32 %s0, 4
      %s16 = int_to_ptr.hbm [resolvable:$true] %s15
      %s17 = sshll.u32 [#allocation2], 4
      %s18 = int_to_ptr.vmem [resolvable:$true] %s17
      %23 = dma.hbm_to_vmem [thread:$0]  %s16, 128, %s18, [#allocation3], 64, 64, 4
    $region5: #{tpu_custom_call.1} parent=1 // pred_fallthru
      _
    // Predicated region
    $region6: #{tpu_custom_call.1} parent=1 // pred_check
      _
    $region7: #{tpu_custom_call.1} parent=1 // pred_check_branch
      %25 = sbr.rel (0) target = $region9
    $region8: #{tpu_custom_call.1} parent=1 // pred_region
      %27 = vsyncadd [#allocation6], 0
      %s28 = sshll.u32 %s1, 4
      %s29 = int_to_ptr.hbm [resolvable:$true] %s28
      %s30 = sshll.u32 [#allocation5], 4
      %s31 = int_to_ptr.vmem [resolvable:$true] %s30
      %36 = dma.hbm_to_vmem [thread:$0]  %s29, 1024, %s31, [#allocation6], 64, 64, 4
    $region9: #{tpu_custom_call.1} parent=1 // pred_fallthru
      _
    // Predicated region
    $region10: #{tpu_custom_call.1} parent=1 // pred_check
      _
    $region11: #{tpu_custom_call.1} parent=1 // pred_check_branch
      %38 = sbr.rel (0) target = $region13
    $region12: #{tpu_custom_call.1} parent=1 // pred_region
      %40 = vsyncadd [#allocation6], 0
      %s42 = sshll.u32 %s2, 4
      %s43 = int_to_ptr.hbm [resolvable:$true] %s42
      %s44 = sshll.u32 [#allocation7], 4
      %s45 = int_to_ptr.vmem [resolvable:$true] %s44
      %47 = dma.hbm_to_vmem [thread:$0]  %s43, 64, %s45, [#allocation6]
    $region13: #{tpu_custom_call.1} parent=1 // pred_fallthru
      _
    // Predicated region
    $region14: #{tpu_custom_call.1} parent=1 // pred_check
      _
    $region15: #{tpu_custom_call.1} parent=1 // pred_check_branch
      %49 = sbr.rel (0) target = $region17
    $region16: #{tpu_custom_call.1} parent=1 // pred_region
      %51 = dma.done [#allocation3], 128
    $region17: #{tpu_custom_call.1} parent=1 // pred_fallthru
      _
    // Predicated region
    $region18: #{tpu_custom_call.1} parent=1 // pred_check
      _
    $region19: #{tpu_custom_call.1} parent=1 // pred_check_branch
      %53 = sbr.rel (0) target = $region21
    $region20: #{tpu_custom_call.1} parent=1 // pred_region
      %55 = dma.done [#allocation6], 1024
    $region21: #{tpu_custom_call.1} parent=1 // pred_fallthru
      _
    // Predicated region
    $region22: #{tpu_custom_call.1} parent=1 // pred_check
      _
    $region23: #{tpu_custom_call.1} parent=1 // pred_check_branch
      %57 = sbr.rel (0) target = $region25
    $region24: #{tpu_custom_call.1} parent=1 // pred_region
      %59 = dma.done [#allocation6], 64
    $region25: #{tpu_custom_call.1} parent=1 // pred_fallthru
      _
    %v60 = vld [vmem:[#allocation2] sm:$0xf]
    %v61 = vld [vmem:[#allocation2 + $0x4] sm:$0xf]
    %v62 = vld [vmem:[#allocation5] sm:$0xf]
    %v63 = vld [vmem:[#allocation5 + $0x4] sm:$0xf]
    %v64 = vld [vmem:[#allocation5 + $0x8] sm:$0xf]
    %v65 = vld [vmem:[#allocation5 + $0xc] sm:$0xf]
    %v66 = vld [vmem:[#allocation5 + $0x10] sm:$0xf]
    %v67 = vld [vmem:[#allocation5 + $0x14] sm:$0xf]
    %v68 = vld [vmem:[#allocation5 + $0x18] sm:$0xf]
    %v69 = vld [vmem:[#allocation5 + $0x1c] sm:$0xf]
    %v70 = vld [vmem:[#allocation5 + $0x20] sm:$0xf]
    %v71 = vld [vmem:[#allocation5 + $0x24] sm:$0xf]
    %v72 = vld [vmem:[#allocation5 + $0x28] sm:$0xf]
    %v73 = vld [vmem:[#allocation5 + $0x2c] sm:$0xf]
    %v74 = vld [vmem:[#allocation5 + $0x30] sm:$0xf]
    %v75 = vld [vmem:[#allocation5 + $0x34] sm:$0xf]
    %v76 = vld [vmem:[#allocation5 + $0x38] sm:$0xf]
    %v77 = vld [vmem:[#allocation5 + $0x3c] sm:$0xf]
    %v78 = vld [vmem:[#allocation7] sm:$0x1]
    %v79 = vld [vmem:[#allocation7 + $0x1] sm:$0x1]
    %v80 = vld [vmem:[#allocation7 + $0x2] sm:$0x1]
    %v81 = vperm.slane %v78, 0
    %v84 = vunpack.c.l.b16 %v60
    %v85 = vunpack.c.l.b16 %v61
    %v86 = vpack.c.b16 %v85, %v84
    %v104 = vunpack.c.l.b16 %v62
    %v105 = vunpack.c.l.b16 %v63
    %v106 = vunpack.c.l.b16 %v64
    %v107 = vunpack.c.l.b16 %v65
    %v108 = vunpack.c.l.b16 %v66
    %v109 = vunpack.c.l.b16 %v67
    %v110 = vunpack.c.l.b16 %v68
    %v111 = vunpack.c.l.b16 %v69
    %v112 = vunpack.c.l.b16 %v70
    %v113 = vunpack.c.l.b16 %v71
    %v114 = vunpack.c.l.b16 %v72
    %v115 = vunpack.c.l.b16 %v73
    %v116 = vunpack.c.l.b16 %v74
    %v117 = vunpack.c.l.b16 %v75
    %v118 = vunpack.c.l.b16 %v76
    %v119 = vunpack.c.l.b16 %v77
    %v120 = vpack.c.b16 %v105, %v104
    %v121 = vpack.c.b16 %v107, %v106
    %v122 = vpack.c.b16 %v109, %v108
    %v123 = vpack.c.b16 %v111, %v110
    %v124 = vpack.c.b16 %v113, %v112
    %v125 = vpack.c.b16 %v115, %v114
    %v126 = vpack.c.b16 %v117, %v116
    %v127 = vpack.c.b16 %v119, %v118
    %136 = vmatpush.bf16.msra.mxu0 %v127
    %137 = vmatpush.bf16.msra.mxu0 %v126
    %138 = vmatpush.bf16.msra.mxu0 %v125
    %139 = vmatpush.bf16.msra.mxu0 %v124
    %140 = vmatpush.bf16.msra.mxu0 %v123
    %141 = vmatpush.bf16.msra.mxu0 %v122
    %142 = vmatpush.bf16.msra.mxu0 %v121
    %143 = vmatpush.bf16.msra.mxu0 %v120
    %144 = vmatmul.bf16.gmra.mxu0 %v86
    %v145 = vpop.f32.mrf.mxu0
    %v146 = vadd.f32 %v81, %v145
    %v147 = vpop.f32.mrf.mxu0
    %v148 = vadd.f32 %v81, %v147
    %149 = vdwg.mxu0
    %vm150 = vcmp.ge.f32.partialorder %v146, 0.0
    %vm151 = vcmp.ge.f32.partialorder %v148, 0.0
    %v152 = vmul.f32 %v146, 0.01
    %v153 = vmul.f32 %v148, 0.01
    %v154 = vsel %vm150, %v146, %v152
    %v155 = vsel %vm151, %v148, %v153
    %v156 = vperm.slane %v79, 0
    %v157 = vmul.f32 %v154, %v156
    %v158 = vmul.f32 %v155, %v156
    %v159 = vperm.slane %v80, 0
    %v160 = vadd.f32 %v157, %v159
    %v161 = vadd.f32 %v158, %v159
    %162 = vst [vmem:[#allocation8] sm:$0xff] %v160
    %163 = vst [vmem:[#allocation8 + $0x8] sm:$0xff] %v161
    // Predicated region
    $region26: #{tpu_custom_call.1} parent=1 // pred_check
      _
    $region27: #{tpu_custom_call.1} parent=1 // pred_check_branch
      %165 = sbr.rel (0) target = $region29
    $region28: #{tpu_custom_call.1} parent=1 // pred_region
      %167 = vsyncadd [#allocation4], 0
      %s168 = sshll.u32 [#allocation8], 4
      %s169 = int_to_ptr.vmem [resolvable:$true] %s168
      %s170 = sshll.u32 %s3, 4
      %s171 = int_to_ptr.hbm [resolvable:$true] %s170
      %176 = dma.vmem_to_hbm [thread:$0]  %s169, 256, %s171, [#allocation4], 128, 128, 8
    $region29: #{tpu_custom_call.1} parent=1 // pred_fallthru
      _
    // Predicated region
    $region30: #{tpu_custom_call.1} parent=1 // pred_check
      _
    $region31: #{tpu_custom_call.1} parent=1 // pred_check_branch
      %178 = sbr.rel (0) target = $region33
    $region32: #{tpu_custom_call.1} parent=1 // pred_region
      %180 = dma.done [#allocation4], 256
    $region33: #{tpu_custom_call.1} parent=1 // pred_fallthru
      _
    %181 = vsyncpa [#allocation3], 1
    %182 = vsyncpa [#allocation6], 1
    %183 = vsyncpa [#allocation4], 1

</llo_original>
